<compile_context>
chip_gen: v5e
topology: v5e:2x2
jax: 0.10.0
libtpu: 0.0.40
codegen_flags: <defaults>
</compile_context>

<pallas_src>
import jax
import jax.numpy as jnp
from jax.experimental import pallas as pl
from jax.experimental.pallas import tpu as pltpu

LEAKY_SLOPE = 0.1
BN_EPS = 1e-5
LANE = 128


# ----------------------------------------------------------------------------
# helpers
# ----------------------------------------------------------------------------
def _round_up(x, m):
    return ((x + m - 1) // m) * m


def _pick_c1_tile(c1_out):
    """MXU-friendly tile along conv1's output channels (= conv2's K dim)."""
    for t in (256, 128):          # 256-multiples feed v6e/v7x's 256-wide MXU
        if c1_out % t == 0:
            return t
    return c1_out                 # full-dim block is always legal


def _vmem_limit_bytes():
    """Per-generation VMEM budget with headroom (v7x has only 64 MiB / TC)."""
    try:
        cap = int(pltpu.get_tpu_info().vmem_capacity_bytes)
    except Exception:
        cap = 64 << 20            # conservative: v7x physical capacity
    return max(16 << 20, min((cap * 3) // 4, 96 << 20))


# ----------------------------------------------------------------------------
# Pallas kernel: fused  conv1(3-tap) + foldedBN-bias + LeakyReLU + conv2(1x1)
# grid = (batch, conv1-channel tiles); axis 1 is the conv2 reduction axis.
# ----------------------------------------------------------------------------
def _scale_pred_kernel(xp_ref, w1_ref, b1_ref, w2_ref, b2_ref, o_ref, acc_ref):
    k_taps = w1_ref.shape[0]                       # conv1 kernel size (3)
    l_out = xp_ref.shape[1] - (k_taps - 1)         # padded length -> L
    c = pl.program_id(1)

    @pl.when(c == 0)
    def _init():
        acc_ref[...] = jnp.zeros_like(acc_ref)

    x = xp_ref[0]                                  # (L + K - 1, Cin) f32
    mm_dtype = w1_ref.dtype                        # bf16 matmul inputs

    # conv1: K shifted tap-matmuls on the MXU, f32 accumulation (no im2col).
    y1 = jnp.dot(x[0:l_out, :].astype(mm_dtype), w1_ref[0],
                 preferred_element_type=jnp.float32)
    for k in range(1, k_taps):
        y1 = y1 + jnp.dot(x[k:k + l_out, :].astype(mm_dtype), w1_ref[k],
                          preferred_element_type=jnp.float32)

    # Folded-BN bias + LeakyReLU(0.1): f32 epilogue (BN scale already in w1).
    y1 = y1 + b1_ref[...]
    y1 = jnp.where(y1 >= 0.0, y1, LEAKY_SLOPE * y1)

    # conv2 (1x1): partial sum over conv1-channel tiles into the accumulator.
    acc_ref[...] += jnp.dot(y1.astype(w2_ref.dtype), w2_ref[...],
                            preferred_element_type=jnp.float32)

    @pl.when(c == pl.num_programs(1) - 1)
    def _finalize():
        o_ref[0] = (acc_ref[...] + b2_ref[...]).astype(o_ref.dtype)


# ----------------------------------------------------------------------------
# parameter construction / packing
# ----------------------------------------------------------------------------
def build_scale_prediction_params(key, in_channels, num_classes,
                                  num_anchors_per_scale=1):
    """Deterministic parameters mirroring ScalePrediction's two CNN1DBlocks."""
    c1_out = 2 * in_channels
    pred_out = num_anchors_per_scale * (num_classes + 3)
    ks = jax.random.split(key, 7)
    w1 = jax.random.normal(ks[0], (c1_out, in_channels, 3),
                           jnp.float32) / jnp.sqrt(3.0 * in_channels)
    gamma = 1.0 + 0.1 * jax.random.normal(ks[1], (c1_out,), jnp.float32)
    beta = 0.1 * jax.random.normal(ks[2], (c1_out,), jnp.float32)
    mean = 0.1 * jax.random.normal(ks[3], (c1_out,), jnp.float32)
    var = 1.0 + 0.5 * jax.random.uniform(ks[4], (c1_out,), jnp.float32)
    w2 = jax.random.normal(ks[5], (pred_out, c1_out, 1),
                           jnp.float32) / jnp.sqrt(float(c1_out))
    b2 = 0.1 * jax.random.normal(ks[6], (pred_out,), jnp.float32)
    return dict(w1=w1, gamma=gamma, beta=beta, mean=mean, var=var,
                w2=w2, b2=b2,
                num_anchors=num_anchors_per_scale, num_classes=num_classes)


def pack_scale_prediction(p):
    """Fold BN into the conv1 weight, lay out for the kernel, pad lanes."""
    w1, gamma, beta, mean, var = p['w1'], p['gamma'], p['beta'], p['mean'], p['var']
    w2, b2 = p['w2'], p['b2']
    c1_out, _, _ = w1.shape
    pred_out = w2.shape[0]

    scale1 = gamma / jnp.sqrt(var + BN_EPS)
    bias1 = beta - mean * scale1
    # BN scale folded into the weight -> kernel epilogue is bias + leaky only.
    w1_packed = jnp.transpose(w1 * scale1[:, None, None],
                              (2, 1, 0)).astype(jnp.bfloat16)   # (K, Cin, C1out)
    b1_packed = bias1.reshape(1, c1_out).astype(jnp.float32)

    # conv2 weight (pred_out, C1out, 1) -> (C1out, pred_out), lane-pad to 128.
    c2p = _round_up(max(pred_out, LANE), LANE)
    w2_mat = jnp.transpose(w2[:, :, 0], (1, 0))
    w2_packed = jnp.pad(w2_mat, ((0, 0), (0, c2p - pred_out))).astype(jnp.bfloat16)
    b2_packed = jnp.pad(b2, (0, c2p - pred_out)).reshape(1, c2p).astype(jnp.float32)

    return dict(w1=w1_packed, b1=b1_packed, w2=w2_packed, b2=b2_packed,
                pred_out=pred_out,
                num_anchors=p['num_anchors'], num_classes=p['num_classes'])


# ----------------------------------------------------------------------------
# forward pass (same semantics / layout contract as the PyTorch module)
# ----------------------------------------------------------------------------
def scale_prediction_forward(packed, x_ncl):
    """x_ncl: (N, Cin, L) float32 (torch NCL). Returns (N, A, L, C+3)."""
    w1, b1, w2, b2 = packed['w1'], packed['b1'], packed['w2'], packed['b2']
    k_taps, c_in, c1_out = w1.shape
    c2p = w2.shape[1]
    pred_out = packed['pred_out']
    a, f = packed['num_anchors'], packed['num_classes'] + 3

    n, c_in_x, l = x_ncl.shape
    assert c_in_x == c_in
    pad = (k_taps - 1) // 2                       # = 1 for the 3-tap conv

    # NLC layout so channels sit on the 128-wide lane axis; pad L once.
    x_nlc = jnp.transpose(x_ncl, (0, 2, 1))
    xp = jnp.pad(x_nlc, ((0, 0), (pad, pad), (0, 0)))

    tc1 = _pick_c1_tile(c1_out)
    n_c1 = c1_out // tc1

    grid_spec = pltpu.PrefetchScalarGridSpec(
        num_scalar_prefetch=0,
        grid=(n, n_c1),
        in_specs=[
            pl.BlockSpec((1, l + 2 * pad, c_in), lambda b, c: (b, 0, 0)),   # xp
            pl.BlockSpec((k_taps, c_in, tc1), lambda b, c: (0, 0, c)),      # w1
            pl.BlockSpec((1, tc1), lambda b, c: (0, c)),                    # b1
            pl.BlockSpec((tc1, c2p), lambda b, c: (c, 0)),                  # w2
            pl.BlockSpec((1, c2p), lambda b, c: (0, 0)),                    # b2
        ],
        out_specs=pl.BlockSpec((1, l, c2p), lambda b, c: (b, 0, 0)),
        scratch_shapes=[pltpu.VMEM((l, c2p), jnp.float32)],
    )

    y = pl.pallas_call(
        _scale_pred_kernel,
        out_shape=jax.ShapeDtypeStruct((n, l, c2p), jnp.float32),
        grid_spec=grid_spec,
        compiler_params=pltpu.CompilerParams(
            dimension_semantics=("parallel", "arbitrary"),
            vmem_limit_bytes=_vmem_limit_bytes(),
        ),
    )(xp, w1, b1, w2, b2)

    y = y[:, :, :pred_out]                        # drop lane padding (128 -> A*(C+3))
    # NLC channel a*F+f  ->  (N, A, L, F)  ==  torch reshape+permute(0,1,3,2)
    return jnp.transpose(y.reshape(n, l, a, f), (0, 2, 1, 3))


# ----------------------------------------------------------------------------
# pure-JAX f32 reference (exact Conv1d / inference-BN / LeakyReLU semantics)
# ----------------------------------------------------------------------------
def scale_prediction_ref(p, x_ncl):
    w1, gamma, beta, mean, var = p['w1'], p['gamma'], p['beta'], p['mean'], p['var']
    w2, b2 = p['w2'], p['b2']
    n, _, l = x_ncl.shape
    c1_out, _, k_taps = w1.shape
    x = jnp.transpose(x_ncl, (0, 2, 1))
    xp = jnp.pad(x, ((0, 0), (1, 1), (0, 0)))
    y1 = jnp.zeros((n, l, c1_out), jnp.float32)
    for k in range(k_taps):
        y1 = y1 + jnp.einsum('nlc,oc->nlo', xp[:, k:k + l, :], w1[:, :, k])
    y1 = (y1 - mean) / jnp.sqrt(var + BN_EPS) * gamma + beta
    y1 = jnp.where(y1 >= 0.0, y1, LEAKY_SLOPE * y1)
    y2 = jnp.einsum('nlc,oc->nlo', y1, w2[:, :, 0]) + b2
    a, f = p['num_anchors'], p['num_classes'] + 3
    return jnp.transpose(y2.reshape(n, l, a, f), (0, 2, 1, 3))


# ----------------------------------------------------------------------------
if __name__ == "__main__":
    key = jax.random.PRNGKey(0)
    configs = [
        # (in_channels, num_classes, num_anchors, batch, length)
        (128, 4, 1, 2, 16),   # single conv1-channel tile (n_c1 == 1)
        (256, 4, 2, 2, 13),   # two tiles -> exercises accumulator init/finalize
    ]
    for (c_in, n_cls, n_anchors, n, l) in configs:
        key, pkey, xkey = jax.random.split(key, 3)
        params = build_scale_prediction_params(pkey, c_in, n_cls, n_anchors)
        packed = pack_scale_prediction(params)
        x_ncl = jax.random.normal(xkey, (n, c_in, l), jnp.float32)  # torch NCL

        out = scale_prediction_forward(packed, x_ncl)
        out = jax.block_until_ready(out)

        ref = scale_prediction_ref(params, x_ncl)
        assert out.shape == (n, n_anchors, l, n_cls + 3), out.shape
        assert bool(jnp.all(jnp.isfinite(out)))
        assert bool(jnp.allclose(out, ref, rtol=0.1, atol=0.1)), \
            float(jnp.max(jnp.abs(out - ref)))

    print("KERNEL_OK")
</pallas_src>

<mosaic_0001>
module attributes {stable_mosaic.version = 11 : i64} {
  func.func @_scale_pred_kernel(%arg0: i32, %arg1: i32, %arg2: memref<1x18x128xf32, #tpu.memory_space<vmem>>, %arg3: memref<3x128x256xbf16, #tpu.memory_space<vmem>>, %arg4: memref<1x256xf32, #tpu.memory_space<vmem>>, %arg5: memref<256x128xbf16, #tpu.memory_space<vmem>>, %arg6: memref<1x128xf32, #tpu.memory_space<vmem>>, %arg7: memref<1x16x128xf32, #tpu.memory_space<vmem>>, %arg8: memref<16x128xf32, #tpu.memory_space<vmem>>) attributes {dimension_semantics = [#tpu.dimension_semantics<parallel>, #tpu.dimension_semantics<arbitrary>], iteration_bounds = array<i64: 2, 1>, scalar_prefetch = 0 : i64, scratch_operands = 1 : i64, tpu.core_type = #tpu.core_type<tc>, window_params = [{transform_indices = @transform_0, window_bounds = array<i64: 1, 18, 128>}, {transform_indices = @transform_1, window_bounds = array<i64: 3, 128, 256>}, {transform_indices = @transform_2, window_bounds = array<i64: 1, 256>}, {transform_indices = @transform_3, window_bounds = array<i64: 256, 128>}, {pipeline_mode = #tpu.pipeline_mode<synchronous>, transform_indices = @transform_4, window_bounds = array<i64: 1, 128>}, {transform_indices = @transform_5, window_bounds = array<i64: 1, 16, 128>}]} {
    %c0_i32 = arith.constant 0 : i32
    %0 = arith.cmpi eq, %arg1, %c0_i32 : i32
    %1 = arith.extui %0 : i1 to i32
    %c0_i32_0 = arith.constant 0 : i32
    %2 = arith.cmpi ne, %1, %c0_i32_0 : i32
    scf.if %2 {
      %cst_25 = arith.constant 0.000000e+00 : f32
      %39 = vector.broadcast %cst_25 : f32 to vector<16x128xf32>
      %c0_26 = arith.constant 0 : index
      %c0_27 = arith.constant 0 : index
      %40 = vector.load %arg8[%c0_26, %c0_27] : memref<16x128xf32, #tpu.memory_space<vmem>>, vector<16x128xf32>
      tpu.vector_store %arg8[%c0_26, %c0_27], %39 {strides = array<i32>} : memref<16x128xf32, #tpu.memory_space<vmem>>, vector<16x128xf32>,
    } else {
    }
    %c0 = arith.constant 0 : index
    %c0_1 = arith.constant 0 : index
    %c0_2 = arith.constant 0 : index
    %3 = vector.load %arg2[%c0, %c0_1, %c0_2] : memref<1x18x128xf32, #tpu.memory_space<vmem>>, vector<1x18x128xf32>
    %4 = vector.shape_cast %3 : vector<1x18x128xf32> to vector<18x128xf32>
    %5 = vector.extract_strided_slice %4 {offsets = [0, 0], sizes = [16, 128], strides = [1, 1]} : vector<18x128xf32> to vector<16x128xf32>
    %6 = arith.truncf %5 : vector<16x128xf32> to vector<16x128xbf16>
    %c0_3 = arith.constant 0 : index
    %c0_4 = arith.constant 0 : index
    %c0_5 = arith.constant 0 : index
    %7 = vector.load %arg3[%c0_3, %c0_4, %c0_5] : memref<3x128x256xbf16, #tpu.memory_space<vmem>>, vector<1x128x256xbf16>
    %8 = vector.shape_cast %7 : vector<1x128x256xbf16> to vector<128x256xbf16>
    %cst = arith.constant dense<0.000000e+00> : vector<16x256xf32>
    %9 = tpu.matmul %6, %8, %cst {dimension_numbers = #tpu.dot_dimension_numbers<[1], [0], [0], [1], [0, 0, 1, 1], [], []>} : vector<16x128xbf16>, vector<128x256xbf16>, vector<16x256xf32> -> vector<16x256xf32>
    %10 = vector.extract_strided_slice %4 {offsets = [1, 0], sizes = [16, 128], strides = [1, 1]} : vector<18x128xf32> to vector<16x128xf32>
    %11 = arith.truncf %10 : vector<16x128xf32> to vector<16x128xbf16>
    %c1 = arith.constant 1 : index
    %c0_6 = arith.constant 0 : index
    %c0_7 = arith.constant 0 : index
    %12 = vector.load %arg3[%c1, %c0_6, %c0_7] : memref<3x128x256xbf16, #tpu.memory_space<vmem>>, vector<1x128x256xbf16>
    %13 = vector.shape_cast %12 : vector<1x128x256xbf16> to vector<128x256xbf16>
    %cst_8 = arith.constant dense<0.000000e+00> : vector<16x256xf32>
    %14 = tpu.matmul %11, %13, %cst_8 {dimension_numbers = #tpu.dot_dimension_numbers<[1], [0], [0], [1], [0, 0, 1, 1], [], []>} : vector<16x128xbf16>, vector<128x256xbf16>, vector<16x256xf32> -> vector<16x256xf32>
    %15 = arith.addf %9, %14 : vector<16x256xf32>
    %16 = vector.extract_strided_slice %4 {offsets = [2, 0], sizes = [16, 128], strides = [1, 1]} : vector<18x128xf32> to vector<16x128xf32>
    %17 = arith.truncf %16 : vector<16x128xf32> to vector<16x128xbf16>
    %c2 = arith.constant 2 : index
    %c0_9 = arith.constant 0 : index
    %c0_10 = arith.constant 0 : index
    %18 = vector.load %arg3[%c2, %c0_9, %c0_10] : memref<3x128x256xbf16, #tpu.memory_space<vmem>>, vector<1x128x256xbf16>
    %19 = vector.shape_cast %18 : vector<1x128x256xbf16> to vector<128x256xbf16>
    %cst_11 = arith.constant dense<0.000000e+00> : vector<16x256xf32>
    %20 = tpu.matmul %17, %19, %cst_11 {dimension_numbers = #tpu.dot_dimension_numbers<[1], [0], [0], [1], [0, 0, 1, 1], [], []>} : vector<16x128xbf16>, vector<128x256xbf16>, vector<16x256xf32> -> vector<16x256xf32>
    %21 = arith.addf %15, %20 : vector<16x256xf32>
    %c0_12 = arith.constant 0 : index
    %c0_13 = arith.constant 0 : index
    %22 = vector.load %arg4[%c0_12, %c0_13] : memref<1x256xf32, #tpu.memory_space<vmem>>, vector<1x256xf32>
    %23 = vector.broadcast %22 : vector<1x256xf32> to vector<16x256xf32>
    %24 = arith.addf %21, %23 : vector<16x256xf32>
    %cst_14 = arith.constant 0.000000e+00 : f32
    %25 = vector.broadcast %cst_14 : f32 to vector<16x256xf32>
    %26 = arith.cmpf oge, %24, %25 : vector<16x256xf32>
    %cst_15 = arith.constant 1.000000e-01 : f32
    %27 = vector.broadcast %cst_15 : f32 to vector<16x256xf32>
    %28 = arith.mulf %27, %24 : vector<16x256xf32>
    %29 = arith.select %26, %24, %28 : vector<16x256xi1>, vector<16x256xf32>
    %c0_16 = arith.constant 0 : index
    %c0_17 = arith.constant 0 : index
    %30 = vector.load %arg8[%c0_16, %c0_17] : memref<16x128xf32, #tpu.memory_space<vmem>>, vector<16x128xf32>
    %31 = arith.truncf %29 : vector<16x256xf32> to vector<16x256xbf16>
    %c0_18 = arith.constant 0 : index
    %c0_19 = arith.constant 0 : index
    %32 = vector.load %arg5[%c0_18, %c0_19] : memref<256x128xbf16, #tpu.memory_space<vmem>>, vector<256x128xbf16>
    %cst_20 = arith.constant dense<0.000000e+00> : vector<16x128xf32>
    %33 = tpu.matmul %31, %32, %cst_20 {dimension_numbers = #tpu.dot_dimension_numbers<[1], [0], [0], [1], [0, 0, 1, 1], [], []>} : vector<16x256xbf16>, vector<256x128xbf16>, vector<16x128xf32> -> vector<16x128xf32>
    %34 = arith.addf %30, %33 : vector<16x128xf32>
    %c0_21 = arith.constant 0 : index
    %c0_22 = arith.constant 0 : index
    %35 = vector.load %arg8[%c0_21, %c0_22] : memref<16x128xf32, #tpu.memory_space<vmem>>, vector<16x128xf32>
    tpu.vector_store %arg8[%c0_21, %c0_22], %34 {strides = array<i32>} : memref<16x128xf32, #tpu.memory_space<vmem>>, vector<16x128xf32>,
    %c0_i32_23 = arith.constant 0 : i32
    %36 = arith.cmpi eq, %arg1, %c0_i32_23 : i32
    %37 = arith.extui %36 : i1 to i32
    %c0_i32_24 = arith.constant 0 : i32
    %38 = arith.cmpi ne, %37, %c0_i32_24 : i32
    scf.if %38 {
      %c0_25 = arith.constant 0 : index
      %c0_26 = arith.constant 0 : index
      %39 = vector.load %arg8[%c0_25, %c0_26] : memref<16x128xf32, #tpu.memory_space<vmem>>, vector<16x128xf32>
      %c0_27 = arith.constant 0 : index
      %c0_28 = arith.constant 0 : index
      %40 = vector.load %arg6[%c0_27, %c0_28] : memref<1x128xf32, #tpu.memory_space<vmem>>, vector<1x128xf32>
      %41 = vector.broadcast %40 : vector<1x128xf32> to vector<16x128xf32>
      %42 = arith.addf %39, %41 : vector<16x128xf32>
      %c0_29 = arith.constant 0 : index
      %c0_30 = arith.constant 0 : index
      %c0_31 = arith.constant 0 : index
      %43 = vector.load %arg7[%c0_29, %c0_30, %c0_31] : memref<1x16x128xf32, #tpu.memory_space<vmem>>, vector<1x16x128xf32>
      %44 = vector.shape_cast %43 : vector<1x16x128xf32> to vector<16x128xf32>
      %45 = vector.shape_cast %42 : vector<16x128xf32> to vector<1x16x128xf32>
      tpu.vector_store %arg7[%c0_29, %c0_30, %c0_31], %45 {strides = array<i32>} : memref<1x16x128xf32, #tpu.memory_space<vmem>>, vector<1x16x128xf32>,
    } else {
    }
    return
  }
  func.func @transform_0(%arg0: i32, %arg1: i32) -> (i32, i32, i32) {
    %c0_i32 = arith.constant 0 : i32
    %c0_i32_0 = arith.constant 0 : i32
    %c0_i32_1 = arith.constant 0 : i32
    return %arg0, %c0_i32, %c0_i32_0 : i32, i32, i32
  }
  func.func @transform_1(%arg0: i32, %arg1: i32) -> (i32, i32, i32) {
    %c0_i32 = arith.constant 0 : i32
    %c0_i32_0 = arith.constant 0 : i32
    %c0_i32_1 = arith.constant 0 : i32
    return %c0_i32, %c0_i32_0, %arg1 : i32, i32, i32
  }
  func.func @transform_2(%arg0: i32, %arg1: i32) -> (i32, i32) {
    %c0_i32 = arith.constant 0 : i32
    %c0_i32_0 = arith.constant 0 : i32
    return %c0_i32, %arg1 : i32, i32
  }
  func.func @transform_3(%arg0: i32, %arg1: i32) -> (i32, i32) {
    %c0_i32 = arith.constant 0 : i32
    %c0_i32_0 = arith.constant 0 : i32
    return %arg1, %c0_i32 : i32, i32
  }
  func.func @transform_4(%arg0: i32, %arg1: i32) -> (i32, i32) {
    %c0_i32 = arith.constant 0 : i32
    %c0_i32_0 = arith.constant 0 : i32
    %c0_i32_1 = arith.constant 0 : i32
    return %c0_i32, %c0_i32_0 : i32, i32
  }
  func.func @transform_5(%arg0: i32, %arg1: i32) -> (i32, i32, i32) {
    %c0_i32 = arith.constant 0 : i32
    %c0_i32_0 = arith.constant 0 : i32
    %c0_i32_1 = arith.constant 0 : i32
    return %arg0, %c0_i32, %c0_i32_0 : i32, i32, i32
  }
}

</mosaic_0001>

<llo_original>
// kernel: tpu_custom_call.1
$region0: #{tpu_custom_call.1}
  #allocation0 [shape = 'u32[]', space=smem, size = 0x4, offset = 0x4, fixed_abs, tag = 'smem constant byte address 0x4 - core index']
  #allocation1 [shape = 'u32[72,128]{1,0:T(1,128)}', space=vmem, size = 0x9000, scoped, tag = 'internal scratch']
  #allocation2 [shape = 'f32[16,128]{1,0:T(8,128)}', space=vmem, size = 0x2000, scoped, tag = 'scratch operand']
  %s0 = inlined_call_operand.vmem [shape: f32[2,18,128], index: 0, kind: input, shape index: {}]
  %s1 = inlined_call_operand.hbm [shape: bf16[3,128,256], index: 1, kind: input, shape index: {}]
  %s2 = inlined_call_operand.vmem [shape: f32[1,256], index: 2, kind: input, shape index: {}]
  %s3 = inlined_call_operand.hbm [shape: bf16[256,128], index: 3, kind: input, shape index: {}]
  %s4 = inlined_call_operand.vmem [shape: f32[1,128], index: 4, kind: input, shape index: {}]
  %s5 = inlined_call_operand.hbm [shape: f32[2,16,128], index: 5, kind: output, shape index: {}]
  %s6 = sld [smem:[#allocation0]]
  $region69: #{tpu_custom_call.1} parent=0
    _
  %s8 = ssub.s32 1, %s6
  %s9 = scalar_select 0, %s8, %s6
  $region1: #{tpu_custom_call.1} parent=0
    #allocation3 [shape = 'u8[196608]{0}', space=vmem, size = 0x30000, scoped, tag = 'input window, operand 1, single buffered']
    #allocation4 [shape = 's32[2]{0}', space=sflag, size = 0x8, scoped, tag = 'scoped memory for tpu_custom_call.1']
    #allocation5 [shape = 's32[2]{0}', space=sflag, size = 0x8, scoped, tag = 'scoped memory for tpu_custom_call.1']
    #allocation6 [shape = 'u8[65536]{0}', space=vmem, size = 0x10000, scoped, tag = 'input window, operand 3, single buffered']
    #allocation7 [shape = 's32[1]{0}', space=sflag, size = 0x4, scoped, tag = 'scoped memory for tpu_custom_call.1']
    #allocation8 [shape = 'u8[16384]{0}', space=vmem, size = 0x4000, scoped, tag = 'output window, operand 0']
    %10 = vsyncpa [#allocation4], 0
    %11 = vsyncpa [#allocation7], 0
    %12 = vsyncpa [#allocation5], 0
    %s13 = scalar_lea.sflag [#allocation5], 1
    %14 = vsyncpa %s13, 0
    loop: start=0, step=1, limit=4
    $region2: #{tpu_custom_call.1} parent=1 // loop_pre_header
      _
    $region3: #{tpu_custom_call.1} parent=1 // loop_header
      %s16 = sphi 0, %s20
      %p17 = scmp.ge.s32.totalorder %s16, 4
      %s23 = sphi 0, %s35
      %s24 = sphi 0, %s31
      %s25 = sphi 0, %s23
      %s26 = sphi 0, %s24
      %s27 = sphi 0, %s25
      %s28 = sphi 0, %s26
      %s38 = sphi 0, %s40
      %s41 = sphi 0, %s38
      %s42 = sphi 0, %s41
      %s58 = sphi 0, %s42
      %s64 = sphi 0, %s66
      %s67 = sphi 0, %s64
      %s68 = sphi 0, %s67
      %s84 = sphi 0, %s68
      %s90 = sphi 0, %s92
      %s93 = sphi 0, %s90
      %s94 = sphi 0, %s93
      %s110 = sphi 0, %s94
      %s116 = sphi 0, %s118
      %s119 = sphi 0, %s116
      %s120 = sphi 0, %s119
      %s136 = sphi 0, %s120
      %s140 = sphi 0, %s140
      %s142 = sphi 0, %s140
      %s143 = sphi 0, %s142
      %s157 = sphi 0, %s143
      %s163 = sphi 0, %s165
      %s166 = sphi 0, %s163
      %s167 = sphi 0, %s166
      %s183 = sphi 0, %s167
    $region4: #{tpu_custom_call.1} parent=1 // loop_header_branch
      %19 = sbr.rel (%p17) target = $region8
    $region5: #{tpu_custom_call.1} parent=1 // loop_body
      %s21 = ssub.s32 %s16, 1
      %s22 = ssub.s32 %s16, 2
      %s29 = sadd.s32 1, %s24
      %p30 = scmp.ge.s32.totalorder %s29, 1
      %s31 = scalar_select %p30, 0, %s29
      %s32 = sadd.s32 1, %s23
      %s33 = scalar_select %p30, %s32, %s23
      %p34 = scmp.ge.s32.totalorder %s33, 2
      %s35 = scalar_select %p34, 0, %s33
      %s36 = ssub.s32 %s23, %s35
      %p37 = scmp.eq.s32.totalorder %s36, 0
      %s39 = sadd.s32 %s38, 1
      %s40 = scalar_select %p37, %s38, %s39
      %p43 = pneg %p37
      %p44 = scmp.eq.s32.totalorder %s16, 1
      %p45 = por %p43, %p44
      %p46 = scmp.ne.s32.totalorder %s38, %s41
      %p47 = scmp.eq.s32.totalorder %s16, 0
      %p48 = por %p46, %p47
      %p49 = scmp.ne.s32.totalorder %s38, %s41
      %p50 = scmp.eq.s32.totalorder %s21, 1
      %p51 = por %p49, %p50
      %p52 = scmp.ne.s32.totalorder %s41, %s42
      %p53 = scmp.eq.s32.totalorder %s21, 0
      %p54 = por %p52, %p53
      %p55 = scmp.ne.s32.totalorder %s41, %s42
      %p56 = scmp.eq.s32.totalorder %s22, 1
      %p57 = por %p55, %p56
      %p59 = scmp.ne.s32.totalorder %s42, %s58
      %p60 = scmp.eq.s32.totalorder %s22, 0
      %p61 = por %p59, %p60
      %s62 = ssub.s32 %s24, %s31
      %p63 = scmp.eq.s32.totalorder %s62, 0
      %s65 = sadd.s32 %s64, 1
      %s66 = scalar_select %p63, %s64, %s65
      %p69 = pneg %p63
      %p70 = scmp.eq.s32.totalorder %s16, 1
      %p71 = por %p69, %p70
      %p72 = scmp.ne.s32.totalorder %s64, %s67
      %p73 = scmp.eq.s32.totalorder %s16, 0
      %p74 = por %p72, %p73
      %p75 = scmp.ne.s32.totalorder %s64, %s67
      %p76 = scmp.eq.s32.totalorder %s21, 1
      %p77 = por %p75, %p76
      %p78 = scmp.ne.s32.totalorder %s67, %s68
      %p79 = scmp.eq.s32.totalorder %s21, 0
      %p80 = por %p78, %p79
      %p81 = scmp.ne.s32.totalorder %s67, %s68
      %p82 = scmp.eq.s32.totalorder %s22, 1
      %p83 = por %p81, %p82
      %p85 = scmp.ne.s32.totalorder %s68, %s84
      %p86 = scmp.eq.s32.totalorder %s22, 0
      %p87 = por %p85, %p86
      %s88 = ssub.s32 %s24, %s31
      %p89 = scmp.eq.s32.totalorder %s88, 0
      %s91 = sadd.s32 %s90, 1
      %s92 = scalar_select %p89, %s90, %s91
      %p95 = pneg %p89
      %p96 = scmp.eq.s32.totalorder %s16, 1
      %p97 = por %p95, %p96
      %p98 = scmp.ne.s32.totalorder %s90, %s93
      %p99 = scmp.eq.s32.totalorder %s16, 0
      %p100 = por %p98, %p99
      %p101 = scmp.ne.s32.totalorder %s90, %s93
      %p102 = scmp.eq.s32.totalorder %s21, 1
      %p103 = por %p101, %p102
      %p104 = scmp.ne.s32.totalorder %s93, %s94
      %p105 = scmp.eq.s32.totalorder %s21, 0
      %p106 = por %p104, %p105
      %p107 = scmp.ne.s32.totalorder %s93, %s94
      %p108 = scmp.eq.s32.totalorder %s22, 1
      %p109 = por %p107, %p108
      %p111 = scmp.ne.s32.totalorder %s94, %s110
      %p112 = scmp.eq.s32.totalorder %s22, 0
      %p113 = por %p111, %p112
      %s114 = ssub.s32 %s24, %s31
      %p115 = scmp.eq.s32.totalorder %s114, 0
      %s117 = sadd.s32 %s116, 1
      %s118 = scalar_select %p115, %s116, %s117
      %p121 = pneg %p115
      %p122 = scmp.eq.s32.totalorder %s16, 1
      %p123 = por %p121, %p122
      %p124 = scmp.ne.s32.totalorder %s116, %s119
      %p125 = scmp.eq.s32.totalorder %s16, 0
      %p126 = por %p124, %p125
      %p127 = scmp.ne.s32.totalorder %s116, %s119
      %p128 = scmp.eq.s32.totalorder %s21, 1
      %p129 = por %p127, %p128
      %p130 = scmp.ne.s32.totalorder %s119, %s120
      %p131 = scmp.eq.s32.totalorder %s21, 0
      %p132 = por %p130, %p131
      %p133 = scmp.ne.s32.totalorder %s119, %s120
      %p134 = scmp.eq.s32.totalorder %s22, 1
      %p135 = por %p133, %p134
      %p137 = scmp.ne.s32.totalorder %s120, %s136
      %p138 = scmp.eq.s32.totalorder %s22, 0
      %p139 = por %p137, %p138
      %s141 = sadd.s32 %s140, 1
      %p144 = scmp.eq.s32.totalorder %s16, 1
      %p145 = scmp.ne.s32.totalorder %s140, %s142
      %p146 = scmp.eq.s32.totalorder %s16, 0
      %p147 = por %p145, %p146
      %p148 = scmp.ne.s32.totalorder %s140, %s142
      %p149 = scmp.eq.s32.totalorder %s21, 1
      %p150 = por %p148, %p149
      %p151 = scmp.ne.s32.totalorder %s142, %s143
      %p152 = scmp.eq.s32.totalorder %s21, 0
      %p153 = por %p151, %p152
      %p154 = scmp.ne.s32.totalorder %s142, %s143
      %p155 = scmp.eq.s32.totalorder %s22, 1
      %p156 = por %p154, %p155
      %p158 = scmp.ne.s32.totalorder %s143, %s157
      %p159 = scmp.eq.s32.totalorder %s22, 0
      %p160 = por %p158, %p159
      %s161 = ssub.s32 %s23, %s35
      %p162 = scmp.eq.s32.totalorder %s161, 0
      %s164 = sadd.s32 %s163, 1
      %s165 = scalar_select %p162, %s163, %s164
      %p168 = pneg %p162
      %p169 = scmp.eq.s32.totalorder %s16, 1
      %p170 = por %p168, %p169
      %p171 = scmp.ne.s32.totalorder %s163, %s166
      %p172 = scmp.eq.s32.totalorder %s16, 0
      %p173 = por %p171, %p172
      %p174 = scmp.ne.s32.totalorder %s163, %s166
      %p175 = scmp.eq.s32.totalorder %s21, 1
      %p176 = por %p174, %p175
      %p177 = scmp.ne.s32.totalorder %s166, %s167
      %p178 = scmp.eq.s32.totalorder %s21, 0
      %p179 = por %p177, %p178
      %p180 = scmp.ne.s32.totalorder %s166, %s167
      %p181 = scmp.eq.s32.totalorder %s22, 1
      %p182 = por %p180, %p181
      %p184 = scmp.ne.s32.totalorder %s167, %s183
      %p185 = scmp.eq.s32.totalorder %s22, 0
      %p186 = por %p184, %p185
      %p187 = scmp.le.s32.totalorder 1, %s16
      %p188 = scmp.lt.s32.totalorder %s16, 3
      %p189 = pnand %p187, %p188
      %p190 = pneg %p189
      // Predicated region
      $region9: #{tpu_custom_call.1} parent=5 // pred_check
        _
      $region10: #{tpu_custom_call.1} parent=5 // pred_check_branch
        %192 = sbr.rel (%p189) target = $region12
      $region11: #{tpu_custom_call.1} parent=5 // pred_region
        %s193 = ssub.s32 %s16, 1
        // Predicated region
        $region13: #{tpu_custom_call.1} parent=11 // pred_check
          %p194 = pneg %p80
        $region14: #{tpu_custom_call.1} parent=11 // pred_check_branch
          %196 = sbr.rel (%p194) target = $region16
        $region15: #{tpu_custom_call.1} parent=11 // pred_region
          %s197 = smul.u32 2, %s26
          %199 = vsyncadd [#allocation4], 0
          %s200 = smul.addr %s197, 4
          %s201 = scalar_lea.hbm %s1, %s200
          %s202 = sshll.u32 %s201, 4
          %s203 = int_to_ptr.hbm [resolvable:$true] %s202
          %s204 = sshll.u32 [#allocation3], 4
          %s205 = int_to_ptr.vmem [resolvable:$true] %s204
          %210 = dma.hbm_to_vmem [thread:$0]  %s203, 6144, %s205, [#allocation4], 128, 128, 8
        $region16: #{tpu_custom_call.1} parent=11 // pred_fallthru
          _
        // Predicated region
        $region17: #{tpu_custom_call.1} parent=11 // pred_check
          %p211 = pneg %p106
        $region18: #{tpu_custom_call.1} parent=11 // pred_check_branch
          %213 = sbr.rel (%p211) target = $region20
        $region19: #{tpu_custom_call.1} parent=11 // pred_region
          %s214 = smul.u32 2, %s26
          %p215 = scmp.lt.s32.totalorder %s214, 1
          %s216 = scalar_select %p215, %s214, 1
          %s217 = scalar_lea.vmem %s2, %s216
          %s218 = smul.u32 2, %s26
        $region20: #{tpu_custom_call.1} parent=11 // pred_fallthru
          _
        // Predicated region
        $region21: #{tpu_custom_call.1} parent=11 // pred_check
          %p219 = pneg %p132
        $region22: #{tpu_custom_call.1} parent=11 // pred_check_branch
          %221 = sbr.rel (%p219) target = $region24
        $region23: #{tpu_custom_call.1} parent=11 // pred_region
          %s222 = smul.u32 32, %s26
          %224 = vsyncadd [#allocation7], 0
          %s225 = smul.addr %s222, 4
          %s226 = scalar_lea.hbm %s3, %s225
          %s227 = sshll.u32 %s226, 4
          %s228 = int_to_ptr.hbm [resolvable:$true] %s227
          %s229 = sshll.u32 [#allocation6], 4
          %s230 = int_to_ptr.vmem [resolvable:$true] %s229
          %235 = dma.hbm_to_vmem [thread:$0]  %s228, 2048, %s230, [#allocation7], 64, 64, 4
        $region24: #{tpu_custom_call.1} parent=11 // pred_fallthru
          _
        // Predicated region
        $region25: #{tpu_custom_call.1} parent=11 // pred_check
          %p236 = pneg %p153
        $region26: #{tpu_custom_call.1} parent=11 // pred_check_branch
          %238 = sbr.rel (%p236) target = $region28
        $region27: #{tpu_custom_call.1} parent=11 // pred_region
          _
        $region28: #{tpu_custom_call.1} parent=11 // pred_fallthru
          _
      $region12: #{tpu_custom_call.1} parent=5 // pred_fallthru
        _
      %p239 = scmp.lt.s32.totalorder %s16, 2
      // Predicated region
      $region29: #{tpu_custom_call.1} parent=5 // pred_check
        %p240 = pneg %p239
      $region30: #{tpu_custom_call.1} parent=5 // pred_check_branch
        %242 = sbr.rel (%p240) target = $region32
      $region31: #{tpu_custom_call.1} parent=5 // pred_region
        // Predicated region
        $region33: #{tpu_custom_call.1} parent=31 // pred_check
          %p243 = pneg %p48
        $region34: #{tpu_custom_call.1} parent=31 // pred_check_branch
          %245 = sbr.rel (%p243) target = $region36
        $region35: #{tpu_custom_call.1} parent=31 // pred_region
          %p246 = scmp.lt.s32.totalorder %s23, 1
          %s247 = scalar_select %p246, %s23, 1
          %s248 = smul.addr %s247, 3
          %s249 = smul.addr %s248, 8
          %s250 = scalar_lea.vmem %s0, %s249
        $region36: #{tpu_custom_call.1} parent=31 // pred_fallthru
          _
      $region32: #{tpu_custom_call.1} parent=5 // pred_fallthru
        _
      %p251 = scmp.le.s32.totalorder 1, %s16
      %p252 = scmp.lt.s32.totalorder %s16, 3
      %p253 = pnand %p251, %p252
      %p254 = pneg %p253
      // Predicated region
      $region37: #{tpu_custom_call.1} parent=5 // pred_check
        _
      $region38: #{tpu_custom_call.1} parent=5 // pred_check_branch
        %256 = sbr.rel (%p253) target = $region40
      $region39: #{tpu_custom_call.1} parent=5 // pred_region
        %s257 = ssub.s32 %s16, 1
        // Predicated region
        $region41: #{tpu_custom_call.1} parent=39 // pred_check
          %p258 = pneg %p80
        $region42: #{tpu_custom_call.1} parent=39 // pred_check_branch
          %260 = sbr.rel (%p258) target = $region44
        $region43: #{tpu_custom_call.1} parent=39 // pred_region
          %262 = dma.done [#allocation4], 6144
        $region44: #{tpu_custom_call.1} parent=39 // pred_fallthru
          _
        // Predicated region
        $region45: #{tpu_custom_call.1} parent=39 // pred_check
          %p263 = pneg %p132
        $region46: #{tpu_custom_call.1} parent=39 // pred_check_branch
          %265 = sbr.rel (%p263) target = $region48
        $region47: #{tpu_custom_call.1} parent=39 // pred_region
          %267 = dma.done [#allocation7], 2048
        $region48: #{tpu_custom_call.1} parent=39 // pred_fallthru
          _
        %p268 = scmp.lt.s32.totalorder %s25, 1
        %s269 = scalar_select %p268, %s25, 1
        %s270 = smul.addr %s269, 3
        %s271 = smul.addr %s270, 8
        %s272 = scalar_lea.vmem %s0, %s271
        %p273 = pneg %p54
        %p274 = pneg %p51
        %p275 = pneg %p80
        %p276 = pneg %p77
        %s277 = smul.u32 2, %s26
        %p278 = scmp.lt.s32.totalorder %s277, 1
        %s279 = scalar_select %p278, %s277, 1
        %s280 = scalar_lea.vmem %s2, %s279
        %p281 = pneg %p106
        %p282 = pneg %p103
        %p283 = pneg %p132
        %p284 = pneg %p129
        %p285 = pneg %p153
        %p286 = pneg %p150
        %p287 = pneg %p179
        %p288 = pneg %p176
        %s289 = sand.u32 %s166, 1
        %s290 = scalar_lea.sflag [#allocation5], %s289
        %s291 = sand.u32 %s166, 1
        %s292 = smul.addr %s291, 16
        %s293 = scalar_lea.vmem [#allocation8], %s292
        %p294 = scmp.lt.s32.totalorder %s25, 1
        %s295 = scalar_select %p294, %s25, 1
        %s296 = smul.addr %s295, 3
        %s297 = smul.addr %s296, 8
        %s298 = scalar_lea.vmem %s0, %s297
        %s299 = smul.u32 2, %s26
        %s300 = smul.u32 2, %s26
        %p301 = scmp.lt.s32.totalorder %s300, 1
        %s302 = scalar_select %p301, %s300, 1
        %s303 = scalar_lea.vmem %s2, %s302
        %s304 = smul.u32 2, %s26
        %s305 = smul.u32 32, %s26
        %p306 = scmp.eq.s32.totalorder %s26, 0
        // Predicated region
        $region49: #{tpu_custom_call.1} parent=39 // pred_check
          %p307 = pneg %p306
        $region50: #{tpu_custom_call.1} parent=39 // pred_check_branch
          %309 = sbr.rel (%p307) target = $region52
        $region51: #{tpu_custom_call.1} parent=39 // pred_region
          %310 = vst [vmem:[#allocation2] sm:$0xff] 0.0
          %311 = vst [vmem:[#allocation2 + $0x8] sm:$0xff] 0.0
        $region52: #{tpu_custom_call.1} parent=39 // pred_fallthru
          _
        %v312 = vld [vmem:[%s298] sm:$0xff]
        %v313 = vld [vmem:[%s298 + $0x8] sm:$0xff]
        %v314 = vld [vmem:[%s298 + $0x10] sm:$0x3]
        %v315 = vpack.c.bf16 %v313, %v312
        %v316 = vld [vmem:[#allocation3] sm:$0xff]
        %v317 = vld [vmem:[#allocation3 + $0x8] sm:$0xff]
        %v318 = vld [vmem:[#allocation3 + $0x10] sm:$0xff]
        %v319 = vld [vmem:[#allocation3 + $0x18] sm:$0xff]
        %v320 = vld [vmem:[#allocation3 + $0x20] sm:$0xff]
        %v321 = vld [vmem:[#allocation3 + $0x28] sm:$0xff]
        %v322 = vld [vmem:[#allocation3 + $0x30] sm:$0xff]
        %v323 = vld [vmem:[#allocation3 + $0x38] sm:$0xff]
        %v324 = vld [vmem:[#allocation3 + $0x40] sm:$0xff]
        %v325 = vld [vmem:[#allocation3 + $0x48] sm:$0xff]
        %v326 = vld [vmem:[#allocation3 + $0x50] sm:$0xff]
        %v327 = vld [vmem:[#allocation3 + $0x58] sm:$0xff]
        %v328 = vld [vmem:[#allocation3 + $0x60] sm:$0xff]
        %v329 = vld [vmem:[#allocation3 + $0x68] sm:$0xff]
        %v330 = vld [vmem:[#allocation3 + $0x70] sm:$0xff]
        %v331 = vld [vmem:[#allocation3 + $0x78] sm:$0xff]
        %v332 = vpack.c.bf16 %v314, %v314
        %s333 = scalar_lea.vmem [#allocation3], 128
        %v334 = vld [vmem:[%s333] sm:$0xff]
        %v335 = vld [vmem:[%s333 + $0x8] sm:$0xff]
        %v336 = vld [vmem:[%s333 + $0x10] sm:$0xff]
        %v337 = vld [vmem:[%s333 + $0x18] sm:$0xff]
        %v338 = vld [vmem:[%s333 + $0x20] sm:$0xff]
        %v339 = vld [vmem:[%s333 + $0x28] sm:$0xff]
        %v340 = vld [vmem:[%s333 + $0x30] sm:$0xff]
        %v341 = vld [vmem:[%s333 + $0x38] sm:$0xff]
        %v342 = vld [vmem:[%s333 + $0x40] sm:$0xff]
        %v343 = vld [vmem:[%s333 + $0x48] sm:$0xff]
        %v344 = vld [vmem:[%s333 + $0x50] sm:$0xff]
        %v345 = vld [vmem:[%s333 + $0x58] sm:$0xff]
        %v346 = vld [vmem:[%s333 + $0x60] sm:$0xff]
        %v347 = vld [vmem:[%s333 + $0x68] sm:$0xff]
        %v348 = vld [vmem:[%s333 + $0x70] sm:$0xff]
        %v349 = vld [vmem:[%s333 + $0x78] sm:$0xff]
        %vm350 = vsmask.f32 7424
        %v352 = vshrl.u32 %v315, 16
        %v354 = vshll.u32 %v315, 16
        %v356 = vrot.slane %v354, 1
        %v357 = vor.u32 %v352, %v356
        %v359 = vshll.u32 %v332, 16
        %v361 = vrot.slane %v359, 1
        %v362 = vsel %vm350, %v357, %v361
        %v380 = vunpack.c.l.b16 %v334
        %v381 = vunpack.c.h.b16 %v334
        %v382 = vunpack.c.l.b16 %v335
        %v383 = vunpack.c.h.b16 %v335
        %v384 = vunpack.c.l.b16 %v336
        %v385 = vunpack.c.h.b16 %v336
        %v386 = vunpack.c.l.b16 %v337
        %v387 = vunpack.c.h.b16 %v337
        %v388 = vunpack.c.l.b16 %v338
        %v389 = vunpack.c.h.b16 %v338
        %v390 = vunpack.c.l.b16 %v339
        %v391 = vunpack.c.h.b16 %v339
        %v392 = vunpack.c.l.b16 %v340
        %v393 = vunpack.c.h.b16 %v340
        %v394 = vunpack.c.l.b16 %v341
        %v395 = vunpack.c.h.b16 %v341
        %v396 = vunpack.c.l.b16 %v342
        %v397 = vunpack.c.h.b16 %v342
        %v398 = vunpack.c.l.b16 %v343
        %v399 = vunpack.c.h.b16 %v343
        %v400 = vunpack.c.l.b16 %v344
        %v401 = vunpack.c.h.b16 %v344
        %v402 = vunpack.c.l.b16 %v345
        %v403 = vunpack.c.h.b16 %v345
        %v404 = vunpack.c.l.b16 %v346
        %v405 = vunpack.c.h.b16 %v346
        %v406 = vunpack.c.l.b16 %v347
        %v407 = vunpack.c.h.b16 %v347
        %v408 = vunpack.c.l.b16 %v348
        %v409 = vunpack.c.h.b16 %v348
        %v410 = vunpack.c.l.b16 %v349
        %v411 = vunpack.c.h.b16 %v349
        %v412 = vpack.c.b16 %v382, %v380
        %v413 = vpack.c.b16 %v383, %v381
        %v414 = vpack.c.b16 %v386, %v384
        %v415 = vpack.c.b16 %v387, %v385
        %v416 = vpack.c.b16 %v390, %v388
        %v417 = vpack.c.b16 %v391, %v389
        %v418 = vpack.c.b16 %v394, %v392
        %v419 = vpack.c.b16 %v395, %v393
        %v420 = vpack.c.b16 %v398, %v396
        %v421 = vpack.c.b16 %v399, %v397
        %v422 = vpack.c.b16 %v402, %v400
        %v423 = vpack.c.b16 %v403, %v401
        %v424 = vpack.c.b16 %v406, %v404
        %v425 = vpack.c.b16 %v407, %v405
        %v426 = vpack.c.b16 %v410, %v408
        %v427 = vpack.c.b16 %v411, %v409
        %444 = vmatpush.bf16.msra.mxu0 %v426
        %445 = vmatpush.bf16.msra.mxu0 %v424
        %446 = vmatpush.bf16.msra.mxu0 %v422
        %447 = vmatpush.bf16.msra.mxu0 %v420
        %448 = vmatpush.bf16.msra.mxu0 %v418
        %449 = vmatpush.bf16.msra.mxu0 %v416
        %450 = vmatpush.bf16.msra.mxu0 %v414
        %451 = vmatpush.bf16.msra.mxu0 %v412
        %452 = vmatmul.bf16.gmra.mxu0 %v362
        %v453 = vpop.f32.mrf.mxu0
        %v454 = vadd.f32 0.0, %v453
        %v455 = vpop.f32.mrf.mxu0
        %v456 = vadd.f32 0.0, %v455
        %457 = vdwg.mxu0
        %458 = vmatpush.bf16.msra.mxu0 %v427
        %459 = vmatpush.bf16.msra.mxu0 %v425
        %460 = vmatpush.bf16.msra.mxu0 %v423
        %461 = vmatpush.bf16.msra.mxu0 %v421
        %462 = vmatpush.bf16.msra.mxu0 %v419
        %463 = vmatpush.bf16.msra.mxu0 %v417
        %464 = vmatpush.bf16.msra.mxu0 %v415
        %465 = vmatpush.bf16.msra.mxu0 %v413
        %466 = vmatmul.bf16.gmra.mxu0 %v362
        %v467 = vpop.f32.mrf.mxu0
        %v468 = vadd.f32 0.0, %v467
        %v469 = vpop.f32.mrf.mxu0
        %v470 = vadd.f32 0.0, %v469
        %471 = vdwg.mxu0
        %v488 = vunpack.c.l.b16 %v316
        %v489 = vunpack.c.h.b16 %v316
        %v490 = vunpack.c.l.b16 %v317
        %v491 = vunpack.c.h.b16 %v317
        %v492 = vunpack.c.l.b16 %v318
        %v493 = vunpack.c.h.b16 %v318
        %v494 = vunpack.c.l.b16 %v319
        %v495 = vunpack.c.h.b16 %v319
        %v496 = vunpack.c.l.b16 %v320
        %v497 = vunpack.c.h.b16 %v320
        %v498 = vunpack.c.l.b16 %v321
        %v499 = vunpack.c.h.b16 %v321
        %v500 = vunpack.c.l.b16 %v322
        %v501 = vunpack.c.h.b16 %v322
        %v502 = vunpack.c.l.b16 %v323
        %v503 = vunpack.c.h.b16 %v323
        %v504 = vunpack.c.l.b16 %v324
        %v505 = vunpack.c.h.b16 %v324
        %v506 = vunpack.c.l.b16 %v325
        %v507 = vunpack.c.h.b16 %v325
        %v508 = vunpack.c.l.b16 %v326
        %v509 = vunpack.c.h.b16 %v326
        %v510 = vunpack.c.l.b16 %v327
        %v511 = vunpack.c.h.b16 %v327
        %v512 = vunpack.c.l.b16 %v328
        %v513 = vunpack.c.h.b16 %v328
        %v514 = vunpack.c.l.b16 %v329
        %v515 = vunpack.c.h.b16 %v329
        %v516 = vunpack.c.l.b16 %v330
        %v517 = vunpack.c.h.b16 %v330
        %v518 = vunpack.c.l.b16 %v331
        %v519 = vunpack.c.h.b16 %v331
        %v520 = vpack.c.b16 %v490, %v488
        %v521 = vpack.c.b16 %v491, %v489
        %v522 = vpack.c.b16 %v494, %v492
        %v523 = vpack.c.b16 %v495, %v493
        %v524 = vpack.c.b16 %v498, %v496
        %v525 = vpack.c.b16 %v499, %v497
        %v526 = vpack.c.b16 %v502, %v500
        %v527 = vpack.c.b16 %v503, %v501
        %v528 = vpack.c.b16 %v506, %v504
        %v529 = vpack.c.b16 %v507, %v505
        %v530 = vpack.c.b16 %v510, %v508
        %v531 = vpack.c.b16 %v511, %v509
        %v532 = vpack.c.b16 %v514, %v512
        %v533 = vpack.c.b16 %v515, %v513
        %v534 = vpack.c.b16 %v518, %v516
        %v535 = vpack.c.b16 %v519, %v517
        %552 = vmatpush.bf16.msra.mxu0 %v534
        %553 = vmatpush.bf16.msra.mxu0 %v532
        %554 = vmatpush.bf16.msra.mxu0 %v530
        %555 = vmatpush.bf16.msra.mxu0 %v528
        %556 = vmatpush.bf16.msra.mxu0 %v526
        %557 = vmatpush.bf16.msra.mxu0 %v524
        %558 = vmatpush.bf16.msra.mxu0 %v522
        %559 = vmatpush.bf16.msra.mxu0 %v520
        %560 = vmatmul.bf16.gmra.mxu0 %v315
        %v561 = vpop.f32.mrf.mxu0
        %v562 = vadd.f32 %v454, %v561
        %v563 = vpop.f32.mrf.mxu0
        %v564 = vadd.f32 %v456, %v563
        %565 = vdwg.mxu0
        %566 = vmatpush.bf16.msra.mxu0 %v535
        %567 = vmatpush.bf16.msra.mxu0 %v533
        %568 = vmatpush.bf16.msra.mxu0 %v531
        %569 = vmatpush.bf16.msra.mxu0 %v529
        %570 = vmatpush.bf16.msra.mxu0 %v527
        %571 = vmatpush.bf16.msra.mxu0 %v525
        %572 = vmatpush.bf16.msra.mxu0 %v523
        %573 = vmatpush.bf16.msra.mxu0 %v521
        %574 = vmatmul.bf16.gmra.mxu0 %v315
        %v575 = vpop.f32.mrf.mxu0
        %v576 = vadd.f32 %v468, %v575
        %v577 = vpop.f32.mrf.mxu0
        %v578 = vadd.f32 %v470, %v577
        %579 = vdwg.mxu0
        %s580 = scalar_lea.vmem [#allocation3], 256
        %v581 = vld [vmem:[%s580] sm:$0xff]
        %v582 = vld [vmem:[%s580 + $0x8] sm:$0xff]
        %v583 = vld [vmem:[%s580 + $0x10] sm:$0xff]
        %v584 = vld [vmem:[%s580 + $0x18] sm:$0xff]
        %v585 = vld [vmem:[%s580 + $0x20] sm:$0xff]
        %v586 = vld [vmem:[%s580 + $0x28] sm:$0xff]
        %v587 = vld [vmem:[%s580 + $0x30] sm:$0xff]
        %v588 = vld [vmem:[%s580 + $0x38] sm:$0xff]
        %v589 = vld [vmem:[%s580 + $0x40] sm:$0xff]
        %v590 = vld [vmem:[%s580 + $0x48] sm:$0xff]
        %v591 = vld [vmem:[%s580 + $0x50] sm:$0xff]
        %v592 = vld [vmem:[%s580 + $0x58] sm:$0xff]
        %v593 = vld [vmem:[%s580 + $0x60] sm:$0xff]
        %v594 = vld [vmem:[%s580 + $0x68] sm:$0xff]
        %v595 = vld [vmem:[%s580 + $0x70] sm:$0xff]
        %v596 = vld [vmem:[%s580 + $0x78] sm:$0xff]
        %vm599 = vcmask 1046528
        %v600 = vrot.slane %v315, 1
        %v601 = vrot.slane %v332, 1
        %v602 = vsel %vm599, %v600, %v601
        %v620 = vunpack.c.l.b16 %v581
        %v621 = vunpack.c.h.b16 %v581
        %v622 = vunpack.c.l.b16 %v582
        %v623 = vunpack.c.h.b16 %v582
        %v624 = vunpack.c.l.b16 %v583
        %v625 = vunpack.c.h.b16 %v583
        %v626 = vunpack.c.l.b16 %v584
        %v627 = vunpack.c.h.b16 %v584
        %v628 = vunpack.c.l.b16 %v585
        %v629 = vunpack.c.h.b16 %v585
        %v630 = vunpack.c.l.b16 %v586
        %v631 = vunpack.c.h.b16 %v586
        %v632 = vunpack.c.l.b16 %v587
        %v633 = vunpack.c.h.b16 %v587
        %v634 = vunpack.c.l.b16 %v588
        %v635 = vunpack.c.h.b16 %v588
        %v636 = vunpack.c.l.b16 %v589
        %v637 = vunpack.c.h.b16 %v589
        %v638 = vunpack.c.l.b16 %v590
        %v639 = vunpack.c.h.b16 %v590
        %v640 = vunpack.c.l.b16 %v591
        %v641 = vunpack.c.h.b16 %v591
        %v642 = vunpack.c.l.b16 %v592
        %v643 = vunpack.c.h.b16 %v592
        %v644 = vunpack.c.l.b16 %v593
        %v645 = vunpack.c.h.b16 %v593
        %v646 = vunpack.c.l.b16 %v594
        %v647 = vunpack.c.h.b16 %v594
        %v648 = vunpack.c.l.b16 %v595
        %v649 = vunpack.c.h.b16 %v595
        %v650 = vunpack.c.l.b16 %v596
        %v651 = vunpack.c.h.b16 %v596
        %v652 = vpack.c.b16 %v622, %v620
        %v653 = vpack.c.b16 %v623, %v621
        %v654 = vpack.c.b16 %v626, %v624
        %v655 = vpack.c.b16 %v627, %v625
        %v656 = vpack.c.b16 %v630, %v628
        %v657 = vpack.c.b16 %v631, %v629
        %v658 = vpack.c.b16 %v634, %v632
        %v659 = vpack.c.b16 %v635, %v633
        %v660 = vpack.c.b16 %v638, %v636
        %v661 = vpack.c.b16 %v639, %v637
        %v662 = vpack.c.b16 %v642, %v640
        %v663 = vpack.c.b16 %v643, %v641
        %v664 = vpack.c.b16 %v646, %v644
        %v665 = vpack.c.b16 %v647, %v645
        %v666 = vpack.c.b16 %v650, %v648
        %v667 = vpack.c.b16 %v651, %v649
        %684 = vmatpush.bf16.msra.mxu0 %v666
        %685 = vmatpush.bf16.msra.mxu0 %v664
        %686 = vmatpush.bf16.msra.mxu0 %v662
        %687 = vmatpush.bf16.msra.mxu0 %v660
        %688 = vmatpush.bf16.msra.mxu0 %v658
        %689 = vmatpush.bf16.msra.mxu0 %v656
        %690 = vmatpush.bf16.msra.mxu0 %v654
        %691 = vmatpush.bf16.msra.mxu0 %v652
        %692 = vmatmul.bf16.gmra.mxu0 %v602
        %v693 = vpop.f32.mrf.mxu0
        %v694 = vadd.f32 0.0, %v693
        %v695 = vpop.f32.mrf.mxu0
        %v696 = vadd.f32 0.0, %v695
        %697 = vdwg.mxu0
        %698 = vmatpush.bf16.msra.mxu0 %v667
        %699 = vmatpush.bf16.msra.mxu0 %v665
        %700 = vmatpush.bf16.msra.mxu0 %v663
        %701 = vmatpush.bf16.msra.mxu0 %v661
        %702 = vmatpush.bf16.msra.mxu0 %v659
        %703 = vmatpush.bf16.msra.mxu0 %v657
        %704 = vmatpush.bf16.msra.mxu0 %v655
        %705 = vmatpush.bf16.msra.mxu0 %v653
        %706 = vmatmul.bf16.gmra.mxu0 %v602
        %v707 = vpop.f32.mrf.mxu0
        %v708 = vadd.f32 0.0, %v707
        %v709 = vpop.f32.mrf.mxu0
        %v710 = vadd.f32 0.0, %v709
        %711 = vdwg.mxu0
        %v712 = vadd.f32 %v562, %v694
        %v713 = vadd.f32 %v576, %v708
        %v714 = vadd.f32 %v564, %v696
        %v715 = vadd.f32 %v578, %v710
        %v716 = vld [vmem:[%s303] sm:$0x3]
        %v718 = vperm.slane %v716, 0
        %v719 = vperm.slane %v716, 1
        %v722 = vadd.f32 %v712, %v718
        %v723 = vadd.f32 %v713, %v719
        %v724 = vadd.f32 %v714, %v718
        %v725 = vadd.f32 %v715, %v719
        %vm726 = vcmp.ge.f32.partialorder %v722, 0.0
        %vm727 = vcmp.ge.f32.partialorder %v723, 0.0
        %vm728 = vcmp.ge.f32.partialorder %v724, 0.0
        %vm729 = vcmp.ge.f32.partialorder %v725, 0.0
        %v730 = vmul.f32 %v722, 0.1
        %v731 = vmul.f32 %v723, 0.1
        %v732 = vmul.f32 %v724, 0.1
        %v733 = vmul.f32 %v725, 0.1
        %v734 = vsel %vm726, %v722, %v730
        %v735 = vsel %vm727, %v723, %v731
        %v736 = vsel %vm728, %v724, %v732
        %v737 = vsel %vm729, %v725, %v733
        %v738 = vld [vmem:[#allocation2] sm:$0xff]
        %v739 = vld [vmem:[#allocation2 + $0x8] sm:$0xff]
        %v740 = vpack.c.bf16 %v736, %v734
        %v741 = vpack.c.bf16 %v737, %v735
        %v742 = vld [vmem:[#allocation6] sm:$0xf]
        %v743 = vld [vmem:[#allocation6 + $0x4] sm:$0xf]
        %v744 = vld [vmem:[#allocation6 + $0x8] sm:$0xf]
        %v745 = vld [vmem:[#allocation6 + $0xc] sm:$0xf]
        %v746 = vld [vmem:[#allocation6 + $0x10] sm:$0xf]
        %v747 = vld [vmem:[#allocation6 + $0x14] sm:$0xf]
        %v748 = vld [vmem:[#allocation6 + $0x18] sm:$0xf]
        %v749 = vld [vmem:[#allocation6 + $0x1c] sm:$0xf]
        %v750 = vld [vmem:[#allocation6 + $0x20] sm:$0xf]
        %v751 = vld [vmem:[#allocation6 + $0x24] sm:$0xf]
        %v752 = vld [vmem:[#allocation6 + $0x28] sm:$0xf]
        %v753 = vld [vmem:[#allocation6 + $0x2c] sm:$0xf]
        %v754 = vld [vmem:[#allocation6 + $0x30] sm:$0xf]
        %v755 = vld [vmem:[#allocation6 + $0x34] sm:$0xf]
        %v756 = vld [vmem:[#allocation6 + $0x38] sm:$0xf]
        %v757 = vld [vmem:[#allocation6 + $0x3c] sm:$0xf]
        %v758 = vld [vmem:[#allocation6 + $0x40] sm:$0xf]
        %v759 = vld [vmem:[#allocation6 + $0x44] sm:$0xf]
        %v760 = vld [vmem:[#allocation6 + $0x48] sm:$0xf]
        %v761 = vld [vmem:[#allocation6 + $0x4c] sm:$0xf]
        %v762 = vld [vmem:[#allocation6 + $0x50] sm:$0xf]
        %v763 = vld [vmem:[#allocation6 + $0x54] sm:$0xf]
        %v764 = vld [vmem:[#allocation6 + $0x58] sm:$0xf]
        %v765 = vld [vmem:[#allocation6 + $0x5c] sm:$0xf]
        %v766 = vld [vmem:[#allocation6 + $0x60] sm:$0xf]
        %v767 = vld [vmem:[#allocation6 + $0x64] sm:$0xf]
        %v768 = vld [vmem:[#allocation6 + $0x68] sm:$0xf]
        %v769 = vld [vmem:[#allocation6 + $0x6c] sm:$0xf]
        %v770 = vld [vmem:[#allocation6 + $0x70] sm:$0xf]
        %v771 = vld [vmem:[#allocation6 + $0x74] sm:$0xf]
        %v772 = vld [vmem:[#allocation6 + $0x78] sm:$0xf]
        %v773 = vld [vmem:[#allocation6 + $0x7c] sm:$0xf]
        %v806 = vunpack.c.l.b16 %v742
        %v807 = vunpack.c.l.b16 %v743
        %v808 = vunpack.c.l.b16 %v744
        %v809 = vunpack.c.l.b16 %v745
        %v810 = vunpack.c.l.b16 %v746
        %v811 = vunpack.c.l.b16 %v747
        %v812 = vunpack.c.l.b16 %v748
        %v813 = vunpack.c.l.b16 %v749
        %v814 = vunpack.c.l.b16 %v750
        %v815 = vunpack.c.l.b16 %v751
        %v816 = vunpack.c.l.b16 %v752
        %v817 = vunpack.c.l.b16 %v753
        %v818 = vunpack.c.l.b16 %v754
        %v819 = vunpack.c.l.b16 %v755
        %v820 = vunpack.c.l.b16 %v756
        %v821 = vunpack.c.l.b16 %v757
        %v822 = vunpack.c.l.b16 %v758
        %v823 = vunpack.c.l.b16 %v759
        %v824 = vunpack.c.l.b16 %v760
        %v825 = vunpack.c.l.b16 %v761
        %v826 = vunpack.c.l.b16 %v762
        %v827 = vunpack.c.l.b16 %v763
        %v828 = vunpack.c.l.b16 %v764
        %v829 = vunpack.c.l.b16 %v765
        %v830 = vunpack.c.l.b16 %v766
        %v831 = vunpack.c.l.b16 %v767
        %v832 = vunpack.c.l.b16 %v768
        %v833 = vunpack.c.l.b16 %v769
        %v834 = vunpack.c.l.b16 %v770
        %v835 = vunpack.c.l.b16 %v771
        %v836 = vunpack.c.l.b16 %v772
        %v837 = vunpack.c.l.b16 %v773
        %v838 = vpack.c.b16 %v807, %v806
        %v839 = vpack.c.b16 %v809, %v808
        %v840 = vpack.c.b16 %v811, %v810
        %v841 = vpack.c.b16 %v813, %v812
        %v842 = vpack.c.b16 %v815, %v814
        %v843 = vpack.c.b16 %v817, %v816
        %v844 = vpack.c.b16 %v819, %v818
        %v845 = vpack.c.b16 %v821, %v820
        %v846 = vpack.c.b16 %v823, %v822
        %v847 = vpack.c.b16 %v825, %v824
        %v848 = vpack.c.b16 %v827, %v826
        %v849 = vpack.c.b16 %v829, %v828
        %v850 = vpack.c.b16 %v831, %v830
        %v851 = vpack.c.b16 %v833, %v832
        %v852 = vpack.c.b16 %v835, %v834
        %v853 = vpack.c.b16 %v837, %v836
        %870 = vmatpush.bf16.msra.mxu0 %v845
        %871 = vmatpush.bf16.msra.mxu0 %v844
        %872 = vmatpush.bf16.msra.mxu0 %v843
        %873 = vmatpush.bf16.msra.mxu0 %v842
        %874 = vmatpush.bf16.msra.mxu0 %v841
        %875 = vmatpush.bf16.msra.mxu0 %v840
        %876 = vmatpush.bf16.msra.mxu0 %v839
        %877 = vmatpush.bf16.msra.mxu0 %v838
        %878 = vmatmul.bf16.gmra.mxu0 %v740
        %v879 = vpop.f32.mrf.mxu0
        %v880 = vadd.f32 0.0, %v879
        %v881 = vpop.f32.mrf.mxu0
        %v882 = vadd.f32 0.0, %v881
        %883 = vdwg.mxu0
        %884 = vmatpush.bf16.msra.mxu0 %v853
        %885 = vmatpush.bf16.msra.mxu0 %v852
        %886 = vmatpush.bf16.msra.mxu0 %v851
        %887 = vmatpush.bf16.msra.mxu0 %v850
        %888 = vmatpush.bf16.msra.mxu0 %v849
        %889 = vmatpush.bf16.msra.mxu0 %v848
        %890 = vmatpush.bf16.msra.mxu0 %v847
        %891 = vmatpush.bf16.msra.mxu0 %v846
        %892 = vmatmul.bf16.gmra.mxu0 %v741
        %v893 = vpop.f32.mrf.mxu0
        %v894 = vadd.f32 %v880, %v893
        %v895 = vpop.f32.mrf.mxu0
        %v896 = vadd.f32 %v882, %v895
        %897 = vdwg.mxu0
        %v898 = vadd.f32 %v738, %v894
        %v899 = vadd.f32 %v739, %v896
        %900 = vst [vmem:[#allocation2] sm:$0xff] %v898
        %901 = vst [vmem:[#allocation2 + $0x8] sm:$0xff] %v899
        // Predicated region
        $region53: #{tpu_custom_call.1} parent=39 // pred_check
          %p902 = pneg %p306
        $region54: #{tpu_custom_call.1} parent=39 // pred_check_branch
          %904 = sbr.rel (%p902) target = $region56
        $region55: #{tpu_custom_call.1} parent=39 // pred_region
          %v905 = vld [vmem:[#allocation2] sm:$0xff]
          %v906 = vld [vmem:[#allocation2 + $0x8] sm:$0xff]
          %v907 = vld [vmem:[%s4] sm:$0x1]
          %v909 = vperm.slane %v907, 0
          %v911 = vadd.f32 %v905, %v909
          %v912 = vadd.f32 %v906, %v909
          %913 = vst [vmem:[%s293] sm:$0xff] %v911
          %914 = vst [vmem:[%s293 + $0x8] sm:$0xff] %v912
        $region56: #{tpu_custom_call.1} parent=39 // pred_fallthru
          _
        %s915 = sand.u32 %s166, 1
        %s916 = scalar_lea.sflag [#allocation5], %s915
        %s917 = sand.u32 %s166, 1
        %s918 = smul.addr %s917, 16
        %s919 = scalar_lea.vmem [#allocation8], %s918
        // Predicated region
        $region57: #{tpu_custom_call.1} parent=39 // pred_check
          %p920 = pneg %p176
        $region58: #{tpu_custom_call.1} parent=39 // pred_check_branch
          %922 = sbr.rel (%p920) target = $region60
        $region59: #{tpu_custom_call.1} parent=39 // pred_region
          %924 = vsyncadd %s916, 0
          %s925 = smul.addr %s25, 2
          %s926 = smul.addr %s925, 8
          %s927 = scalar_lea.hbm %s5, %s926
          %s928 = sshll.u32 %s919, 4
          %s929 = int_to_ptr.vmem [resolvable:$true] %s928
          %s930 = sshll.u32 %s927, 4
          %s931 = int_to_ptr.hbm [resolvable:$true] %s930
          %936 = dma.vmem_to_hbm [thread:$0]  %s929, 256, %s931, %s916, 128, 128, 8
        $region60: #{tpu_custom_call.1} parent=39 // pred_fallthru
          _
      $region40: #{tpu_custom_call.1} parent=5 // pred_fallthru
        _
      %p937 = scmp.le.s32.totalorder 2, %s16
      // Predicated region
      $region61: #{tpu_custom_call.1} parent=5 // pred_check
        %p938 = pneg %p937
      $region62: #{tpu_custom_call.1} parent=5 // pred_check_branch
        %940 = sbr.rel (%p938) target = $region64
      $region63: #{tpu_custom_call.1} parent=5 // pred_region
        %s941 = ssub.s32 %s16, 2
        // Predicated region
        $region65: #{tpu_custom_call.1} parent=63 // pred_check
          %p942 = pneg %p182
        $region66: #{tpu_custom_call.1} parent=63 // pred_check_branch
          %944 = sbr.rel (%p942) target = $region68
        $region67: #{tpu_custom_call.1} parent=63 // pred_region
          %s945 = sand.u32 %s167, 1
          %s946 = scalar_lea.sflag [#allocation5], %s945
          %s947 = sand.u32 %s167, 1
          %s948 = smul.addr %s947, 16
          %s949 = scalar_lea.vmem [#allocation8], %s948
          %951 = dma.done %s946, 256
        $region68: #{tpu_custom_call.1} parent=63 // pred_fallthru
          _
      $region64: #{tpu_custom_call.1} parent=5 // pred_fallthru
        _
    $region6: #{tpu_custom_call.1} parent=1 // loop_footer
      %s20 = sadd.s32 1, %s16
    $region7: #{tpu_custom_call.1} parent=1 // loop_footer_branch
      %15 = sbr.rel target = $region3
    $region8: #{tpu_custom_call.1} parent=1 // loop_exit
      _
    %952 = vsyncpa [#allocation4], 1
    %s953 = scalar_lea.sflag [#allocation4], 1
    %954 = vsyncpa %s953, 1
    %955 = vsyncpa [#allocation7], 1
    %956 = vsyncpa [#allocation5], 1
    %s957 = scalar_lea.sflag [#allocation5], 1
    %958 = vsyncpa %s957, 1

</llo_original>
